<compile_context>
chip_gen: v7x
topology: tpu7x:2x2x1
jax: 0.10.0
libtpu: 0.0.40
codegen_flags: <defaults>
</compile_context>

<pallas_src>
import functools

import jax
import jax.numpy as jnp
from jax.experimental import pallas as pl
from jax.experimental.pallas import tpu as pltpu


def _arm_head_kernel(x_ref, w_ref, b_ref, o_ref, *, H, W, Cf):
    """One grid step = one (feature-map, batch-element) pair.

    x_ref: (1, 1, R, Cin)    spatially pre-padded, flattened NHWC rows (bf16);
                             R >= (H+2)*(W+2)+2, the extra rows are zero.
    w_ref: (1, Cin, 9*Cf)    fused loc||conf weights (bf16); column block t of
                             width Cf holds tap (kh, kw) with t = kh*3 + kw.
    b_ref: (1, 1, Cf)        fused bias (f32).
    o_ref: (1, 1, L, Cf)     flat output rows; row = i*(W+2)+j (columns j >= W
                             are garbage and sliced off by the wrapper).
    """
    Wp2 = W + 2
    L = H * Wp2

    x = x_ref[0, 0]                      # (R, Cin)    bf16
    w = w_ref[0]                         # (Cin, 9*Cf) bf16

    # Single wide MXU matmul covering all 9 taps; f32 accumulation.
    p = jnp.dot(x, w, preferred_element_type=jnp.float32)      # (R, 9*Cf)

    # Bias-in-init accumulator (f32) saves a separate elementwise pass.
    acc = jnp.broadcast_to(b_ref[0], (L, Cf)).astype(jnp.float32)

    # 3x3 same-padding conv: tap (kh, kw) is a pure row offset kh*(W+2)+kw and
    # a Cf-wide column block of the single matmul result.  The wide Cin-sized
    # activation is never sliced or reshaped inside the kernel.
    for t in range(9):
        kh, kw = divmod(t, 3)
        off = kh * Wp2 + kw
        acc = acc + p[off:off + L, t * Cf:(t + 1) * Cf]

    o_ref[0, 0] = acc.astype(o_ref.dtype)


@functools.partial(jax.jit, static_argnames=("H", "W", "c_loc"))
def _arm_group_forward(xs_nchw, w_stack, b_stack, *, H, W, c_loc):
    """Fused loc+conf 3x3 conv (stride 1, padding 1) for a group of feature
    maps that share (Cin, H, W).

    xs_nchw: tuple of G arrays, each (N, Cin, H, W) float32
    w_stack: (G, Cin, 9*Cf)  bfloat16 fused weights in kernel layout
    b_stack: (G, 1, Cf)      float32 fused bias
    Returns loc (G, N, c_loc, H, W), conf (G, N, Cf - c_loc, H, W), both f32.
    """
    G = len(xs_nchw)
    N, Cin, _, _ = xs_nchw[0].shape
    Cf = w_stack.shape[-1] // 9
    Hp2, Wp2 = H + 2, W + 2
    L = H * Wp2
    # Flat padded row count: >= (H+2)*(W+2)+2 so the last tap's row slice stays
    # in bounds; rounded up to a sublane multiple.
    R = ((Hp2 * Wp2 + 2 + 7) // 8) * 8

    # NCHW -> NHWC (lane-dense channels), zero-pad spatial by 1, flatten rows,
    # pad rows to R, cast to bf16 for the MXU.
    x = jnp.stack(xs_nchw, axis=0)                        # (G, N, Cin, H, W)
    x = jnp.transpose(x, (0, 1, 3, 4, 2))                 # (G, N, H, W, Cin)
    x = jnp.pad(x, ((0, 0), (0, 0), (1, 1), (1, 1), (0, 0)))
    x = x.reshape(G, N, Hp2 * Wp2, Cin)
    x = jnp.pad(x, ((0, 0), (0, 0), (0, R - Hp2 * Wp2), (0, 0)))
    x = x.astype(jnp.bfloat16)

    cost = pl.CostEstimate(
        flops=2 * G * N * R * Cin * 9 * Cf,
        transcendentals=0,
        bytes_accessed=(2 * G * N * R * Cin + 2 * G * Cin * 9 * Cf
                        + 4 * G * Cf + 4 * G * N * L * Cf),
    )

    out = pl.pallas_call(
        functools.partial(_arm_head_kernel, H=H, W=W, Cf=Cf),
        out_shape=jax.ShapeDtypeStruct((G, N, L, Cf), jnp.float32),
        grid_spec=pltpu.PrefetchScalarGridSpec(
            num_scalar_prefetch=0,
            grid=(G, N),
            in_specs=[
                pl.BlockSpec((1, 1, R, Cin), lambda g, n: (g, n, 0, 0)),
                pl.BlockSpec((1, Cin, 9 * Cf), lambda g, n: (g, 0, 0)),
                pl.BlockSpec((1, 1, Cf), lambda g, n: (g, 0, 0)),
            ],
            out_specs=pl.BlockSpec((1, 1, L, Cf), lambda g, n: (g, n, 0, 0)),
        ),
        compiler_params=pltpu.CompilerParams(
            dimension_semantics=("parallel", "parallel")),
        cost_estimate=cost,
    )(x, w_stack, b_stack)

    # Un-flatten rows, drop the 2 padded columns, split loc/conf, back to NCHW.
    out = out.reshape(G, N, H, Wp2, Cf)[:, :, :, :W, :]
    loc = jnp.transpose(out[..., :c_loc], (0, 1, 4, 2, 3))
    conf = jnp.transpose(out[..., c_loc:], (0, 1, 4, 2, 3))
    return loc, conf


def _init_conv_params(key, cout, cin):
    kw_, kb = jax.random.split(key)
    # Deterministic small-scale init (synthetic weights, not a checkpoint).
    w = jax.random.normal(kw_, (cout, cin, 3, 3), jnp.float32) * 0.02
    b = jax.random.normal(kb, (cout,), jnp.float32) * 0.01
    return w, b


class ARMPallas:
    """JAX/Pallas port of the PyTorch ARM module."""

    _FEATS = (("conv4_3", 512), ("conv5_3", 512),
              ("convfc7", 1024), ("conv6_2", 512))

    def __init__(self, num_bbox, key):
        self.num_bbox = num_bbox
        self.c_loc = num_bbox * 4
        self.c_conf = num_bbox * 2
        specs = []
        for feat, cin in self._FEATS:
            specs.append((feat + "_loc", cin, self.c_loc))
            specs.append((feat + "_conf", cin, self.c_conf))
        keys = jax.random.split(key, len(specs))
        self.params = {}
        for (name, cin, cout), k in zip(specs, keys):
            self.params[name] = _init_conv_params(k, cout, cin)

        # Precompute fused (loc || conf) weights in kernel layout, once:
        # (Cf, Cin, 3, 3) -> tap-major, lane-dense (Cin, 9*Cf), bf16.
        self.fused_w = {}
        self.fused_b = {}
        for feat, cin in self._FEATS:
            wl, bl = self.params[feat + "_loc"]
            wc, bc = self.params[feat + "_conf"]
            w = jnp.concatenate([wl, wc], axis=0)             # (Cf, Cin, 3, 3)
            b = jnp.concatenate([bl, bc], axis=0)             # (Cf,)
            cf = w.shape[0]
            w_taps = jnp.transpose(w, (2, 3, 1, 0)).reshape(9, cin, cf)
            w_all = jnp.transpose(w_taps, (1, 0, 2)).reshape(cin, 9 * cf)
            self.fused_w[feat] = w_all.astype(jnp.bfloat16)
            self.fused_b[feat] = b.reshape(1, cf)
        self._stack_cache = {}

    def _stacks(self, names):
        key = tuple(names)
        if key not in self._stack_cache:
            w_stack = jnp.stack([self.fused_w[n] for n in names], axis=0)
            b_stack = jnp.stack([self.fused_b[n] for n in names], axis=0)
            self._stack_cache[key] = (w_stack, b_stack)
        return self._stack_cache[key]

    def __call__(self, conv4_3, conv5_3, conv_fc7, conv6_2):
        feats = {"conv4_3": conv4_3, "conv5_3": conv5_3,
                 "convfc7": conv_fc7, "conv6_2": conv6_2}
        # Group feature maps sharing (Cin, H, W) into one fused pallas_call.
        groups = {}
        for feat, _ in self._FEATS:
            shape_key = tuple(feats[feat].shape[1:])
            groups.setdefault(shape_key, []).append(feat)

        loc_by_feat, conf_by_feat = {}, {}
        for (cin, H, W), names in groups.items():
            xs = tuple(feats[n] for n in names)
            w_stack, b_stack = self._stacks(names)
            loc, conf = _arm_group_forward(xs, w_stack, b_stack,
                                           H=H, W=W, c_loc=self.c_loc)
            for gi, n in enumerate(names):
                loc_by_feat[n] = loc[gi]
                conf_by_feat[n] = conf[gi]

        order = [f for f, _ in self._FEATS]
        armloc_list = [loc_by_feat[f] for f in order]
        armconf_list = [conf_by_feat[f] for f in order]
        return (armloc_list, armconf_list)


def _conv_reference(x, w, b):
    """Pure-JAX reference (lax conv, f32) for correctness checking."""
    y = jax.lax.conv_general_dilated(
        x, w, window_strides=(1, 1), padding=((1, 1), (1, 1)),
        dimension_numbers=("NCHW", "OIHW", "NCHW"))
    return y + b[None, :, None, None]


if __name__ == "__main__":
    key = jax.random.PRNGKey(0)
    k_model, k4, k5, k7, k6 = jax.random.split(key, 5)

    num_bbox = 3
    N, H, W = 2, 8, 8  # small spatial sizes; channel counts fixed by the module

    conv4_3 = jax.random.normal(k4, (N, 512, H, W), jnp.float32)
    conv5_3 = jax.random.normal(k5, (N, 512, H, W), jnp.float32)
    conv_fc7 = jax.random.normal(k7, (N, 1024, H, W), jnp.float32)
    conv6_2 = jax.random.normal(k6, (N, 512, H, W), jnp.float32)

    arm = ARMPallas(num_bbox, k_model)
    armloc_list, armconf_list = arm(conv4_3, conv5_3, conv_fc7, conv6_2)
    jax.block_until_ready((armloc_list, armconf_list))

    # Shape checks (match PyTorch semantics).
    for y in armloc_list:
        assert y.shape == (N, num_bbox * 4, H, W), y.shape
    for y in armconf_list:
        assert y.shape == (N, num_bbox * 2, H, W), y.shape

    # Numerical check against f32 jax.lax conv per head.  Tolerance is loosened
    # vs. the f32 kernel because MXU operands are now bf16 (Cin = 512-1024
    # reductions with f32 accumulation).
    feats = {"conv4_3": conv4_3, "conv5_3": conv5_3,
             "convfc7": conv_fc7, "conv6_2": conv6_2}
    outs = dict(zip(
        ["conv4_3_loc", "conv5_3_loc", "convfc7_loc", "conv6_2_loc",
         "conv4_3_conf", "conv5_3_conf", "convfc7_conf", "conv6_2_conf"],
        armloc_list + armconf_list))
    for name, y in outs.items():
        feat = feats[name.rsplit("_", 1)[0]]
        w, b = arm.params[name]
        ref = _conv_reference(feat, w, b)
        assert jnp.allclose(y, ref, atol=5e-2, rtol=5e-2), name

    print("KERNEL_OK")
</pallas_src>

<mosaic_0001>
module attributes {stable_mosaic.version = 11 : i64} {
  func.func @_arm_head_kernel(%arg0: i32, %arg1: i32, %arg2: memref<1x1x104x512xbf16, #tpu.memory_space<vmem>>, %arg3: memref<1x512x162xbf16, #tpu.memory_space<vmem>>, %arg4: memref<1x1x18xf32, #tpu.memory_space<vmem>>, %arg5: memref<1x1x80x18xf32, #tpu.memory_space<vmem>>) attributes {dimension_semantics = [#tpu.dimension_semantics<parallel>, #tpu.dimension_semantics<parallel>], iteration_bounds = array<i64: 3, 2>, scalar_prefetch = 0 : i64, scratch_operands = 0 : i64, tpu.core_type = #tpu.core_type<tc>, window_params = [{transform_indices = @transform_0, window_bounds = array<i64: 1, 1, 104, 512>}, {transform_indices = @transform_1, window_bounds = array<i64: 1, 512, 162>}, {transform_indices = @transform_2, window_bounds = array<i64: 1, 1, 18>}, {transform_indices = @transform_3, window_bounds = array<i64: 1, 1, 80, 18>}]} {
    %c0 = arith.constant 0 : index
    %c0_0 = arith.constant 0 : index
    %c0_1 = arith.constant 0 : index
    %c0_2 = arith.constant 0 : index
    %0 = vector.load %arg2[%c0, %c0_0, %c0_1, %c0_2] : memref<1x1x104x512xbf16, #tpu.memory_space<vmem>>, vector<1x1x104x512xbf16>
    %1 = vector.shape_cast %0 : vector<1x1x104x512xbf16> to vector<104x512xbf16>
    %c0_3 = arith.constant 0 : index
    %c0_4 = arith.constant 0 : index
    %c0_5 = arith.constant 0 : index
    %2 = vector.load %arg3[%c0_3, %c0_4, %c0_5] : memref<1x512x162xbf16, #tpu.memory_space<vmem>>, vector<1x512x162xbf16>
    %3 = vector.shape_cast %2 : vector<1x512x162xbf16> to vector<512x162xbf16>
    %cst = arith.constant dense<0.000000e+00> : vector<104x162xf32>
    %4 = tpu.matmul %1, %3, %cst {dimension_numbers = #tpu.dot_dimension_numbers<[1], [0], [0], [1], [0, 0, 1, 1], [], []>} : vector<104x512xbf16>, vector<512x162xbf16>, vector<104x162xf32> -> vector<104x162xf32>
    %c0_6 = arith.constant 0 : index
    %c0_7 = arith.constant 0 : index
    %c0_8 = arith.constant 0 : index
    %5 = vector.load %arg4[%c0_6, %c0_7, %c0_8] : memref<1x1x18xf32, #tpu.memory_space<vmem>>, vector<1x1x18xf32>
    %6 = vector.shape_cast %5 : vector<1x1x18xf32> to vector<1x18xf32>
    %7 = vector.shape_cast %6 : vector<1x18xf32> to vector<1x18xf32>
    %8 = vector.broadcast %7 : vector<1x18xf32> to vector<80x18xf32>
    %9 = vector.extract_strided_slice %4 {offsets = [0, 0], sizes = [80, 18], strides = [1, 1]} : vector<104x162xf32> to vector<80x18xf32>
    %10 = arith.addf %8, %9 : vector<80x18xf32>
    %11 = vector.extract_strided_slice %4 {offsets = [1, 18], sizes = [80, 18], strides = [1, 1]} : vector<104x162xf32> to vector<80x18xf32>
    %12 = arith.addf %10, %11 : vector<80x18xf32>
    %13 = vector.extract_strided_slice %4 {offsets = [2, 36], sizes = [80, 18], strides = [1, 1]} : vector<104x162xf32> to vector<80x18xf32>
    %14 = arith.addf %12, %13 : vector<80x18xf32>
    %15 = vector.extract_strided_slice %4 {offsets = [10, 54], sizes = [80, 18], strides = [1, 1]} : vector<104x162xf32> to vector<80x18xf32>
    %16 = arith.addf %14, %15 : vector<80x18xf32>
    %17 = vector.extract_strided_slice %4 {offsets = [11, 72], sizes = [80, 18], strides = [1, 1]} : vector<104x162xf32> to vector<80x18xf32>
    %18 = arith.addf %16, %17 : vector<80x18xf32>
    %19 = vector.extract_strided_slice %4 {offsets = [12, 90], sizes = [80, 18], strides = [1, 1]} : vector<104x162xf32> to vector<80x18xf32>
    %20 = arith.addf %18, %19 : vector<80x18xf32>
    %21 = vector.extract_strided_slice %4 {offsets = [20, 108], sizes = [80, 18], strides = [1, 1]} : vector<104x162xf32> to vector<80x18xf32>
    %22 = arith.addf %20, %21 : vector<80x18xf32>
    %23 = vector.extract_strided_slice %4 {offsets = [21, 126], sizes = [80, 18], strides = [1, 1]} : vector<104x162xf32> to vector<80x18xf32>
    %24 = arith.addf %22, %23 : vector<80x18xf32>
    %25 = vector.extract_strided_slice %4 {offsets = [22, 144], sizes = [80, 18], strides = [1, 1]} : vector<104x162xf32> to vector<80x18xf32>
    %26 = arith.addf %24, %25 : vector<80x18xf32>
    %c0_9 = arith.constant 0 : index
    %c0_10 = arith.constant 0 : index
    %c0_11 = arith.constant 0 : index
    %c0_12 = arith.constant 0 : index
    %27 = vector.load %arg5[%c0_9, %c0_10, %c0_11, %c0_12] : memref<1x1x80x18xf32, #tpu.memory_space<vmem>>, vector<1x1x80x18xf32>
    %28 = vector.shape_cast %27 : vector<1x1x80x18xf32> to vector<80x18xf32>
    %29 = vector.shape_cast %26 : vector<80x18xf32> to vector<1x1x80x18xf32>
    tpu.vector_store %arg5[%c0_9, %c0_10, %c0_11, %c0_12], %29 {strides = array<i32>} : memref<1x1x80x18xf32, #tpu.memory_space<vmem>>, vector<1x1x80x18xf32>,
    return
  }
  func.func @transform_0(%arg0: i32, %arg1: i32) -> (i32, i32, i32, i32) {
    %c0_i32 = arith.constant 0 : i32
    %c0_i32_0 = arith.constant 0 : i32
    %c0_i32_1 = arith.constant 0 : i32
    return %arg0, %arg1, %c0_i32, %c0_i32_0 : i32, i32, i32, i32
  }
  func.func @transform_1(%arg0: i32, %arg1: i32) -> (i32, i32, i32) {
    %c0_i32 = arith.constant 0 : i32
    %c0_i32_0 = arith.constant 0 : i32
    %c0_i32_1 = arith.constant 0 : i32
    return %arg0, %c0_i32, %c0_i32_0 : i32, i32, i32
  }
  func.func @transform_2(%arg0: i32, %arg1: i32) -> (i32, i32, i32) {
    %c0_i32 = arith.constant 0 : i32
    %c0_i32_0 = arith.constant 0 : i32
    %c0_i32_1 = arith.constant 0 : i32
    return %arg0, %c0_i32, %c0_i32_0 : i32, i32, i32
  }
  func.func @transform_3(%arg0: i32, %arg1: i32) -> (i32, i32, i32, i32) {
    %c0_i32 = arith.constant 0 : i32
    %c0_i32_0 = arith.constant 0 : i32
    %c0_i32_1 = arith.constant 0 : i32
    return %arg0, %arg1, %c0_i32, %c0_i32_0 : i32, i32, i32, i32
  }
}

</mosaic_0001>

<llo_original>
// kernel: _arm_group_forward.1
$region0: #{_arm_group_forward.1}
  #allocation0 [shape = 'u32[]', space=smem, size = 0x4, offset = 0x4, fixed_abs, tag = 'smem constant byte address 0x4 - core index']
  #allocation1 [shape = 'u32[144,128]{1,0:T(1,128)}', space=vmem, size = 0x12000, scoped, tag = 'internal scratch']
  %s0 = inlined_call_operand.vmem [shape: bf16[3,2,104,512], index: 0, kind: input, shape index: {}]
  %s1 = inlined_call_operand.vmem [shape: bf16[3,512,162], index: 1, kind: input, shape index: {}]
  %s2 = inlined_call_operand.vmem [shape: f32[3,1,18], index: 2, kind: input, shape index: {}]
  %s3 = inlined_call_operand.vmem [shape: f32[3,2,80,18], index: 3, kind: output, shape index: {}]
  %s4 = sld [smem:[#allocation0]]
  $region45: #{_arm_group_forward.1} parent=0
    _
  %s6 = ssub.s32 1, %s4
  %s7 = scalar_select 0, %s6, %s4
  loop: start=0, step=1, limit=8
  $region2: #{_arm_group_forward.1} parent=0 // loop_pre_header
    _
  $region3: #{_arm_group_forward.1} parent=0 // loop_header
    %s9 = sphi 0, %s13
    %p10 = scmp.ge.s32.totalorder %s9, 8
    %s16 = sphi 0, %s28
    %s17 = sphi 0, %s24
    %s18 = sphi 0, %s16
    %s19 = sphi 0, %s17
    %s20 = sphi 0, %s18
    %s21 = sphi 0, %s19
    %s33 = sphi 0, %s35
    %s36 = sphi 0, %s33
    %s37 = sphi 0, %s36
    %s53 = sphi 0, %s37
    %s59 = sphi 0, %s61
    %s62 = sphi 0, %s59
    %s63 = sphi 0, %s62
    %s79 = sphi 0, %s63
    %s85 = sphi 0, %s87
    %s88 = sphi 0, %s85
    %s89 = sphi 0, %s88
    %s105 = sphi 0, %s89
    %s113 = sphi 0, %s115
    %s116 = sphi 0, %s113
    %s117 = sphi 0, %s116
    %s133 = sphi 0, %s117
  $region4: #{_arm_group_forward.1} parent=0 // loop_header_branch
    %12 = sbr.rel (%p10) target = $region8
  $region5: #{_arm_group_forward.1} parent=0 // loop_body
    %s14 = ssub.s32 %s9, 1
    %s15 = ssub.s32 %s9, 2
    %s22 = sadd.s32 1, %s17
    %p23 = scmp.ge.s32.totalorder %s22, 2
    %s24 = scalar_select %p23, 0, %s22
    %s25 = sadd.s32 1, %s16
    %s26 = scalar_select %p23, %s25, %s16
    %p27 = scmp.ge.s32.totalorder %s26, 3
    %s28 = scalar_select %p27, 0, %s26
    %s29 = ssub.s32 %s16, %s28
    %s30 = ssub.s32 %s17, %s24
    %s31 = sor.u32 %s29, %s30
    %p32 = scmp.eq.s32.totalorder %s31, 0
    %s34 = sadd.s32 %s33, 1
    %s35 = scalar_select %p32, %s33, %s34
    %p38 = pneg %p32
    %p39 = scmp.eq.s32.totalorder %s9, 5
    %p40 = por %p38, %p39
    %p41 = scmp.ne.s32.totalorder %s33, %s36
    %p42 = scmp.eq.s32.totalorder %s9, 0
    %p43 = por %p41, %p42
    %p44 = scmp.ne.s32.totalorder %s33, %s36
    %p45 = scmp.eq.s32.totalorder %s14, 5
    %p46 = por %p44, %p45
    %p47 = scmp.ne.s32.totalorder %s36, %s37
    %p48 = scmp.eq.s32.totalorder %s14, 0
    %p49 = por %p47, %p48
    %p50 = scmp.ne.s32.totalorder %s36, %s37
    %p51 = scmp.eq.s32.totalorder %s15, 5
    %p52 = por %p50, %p51
    %p54 = scmp.ne.s32.totalorder %s37, %s53
    %p55 = scmp.eq.s32.totalorder %s15, 0
    %p56 = por %p54, %p55
    %s57 = ssub.s32 %s16, %s28
    %p58 = scmp.eq.s32.totalorder %s57, 0
    %s60 = sadd.s32 %s59, 1
    %s61 = scalar_select %p58, %s59, %s60
    %p64 = pneg %p58
    %p65 = scmp.eq.s32.totalorder %s9, 5
    %p66 = por %p64, %p65
    %p67 = scmp.ne.s32.totalorder %s59, %s62
    %p68 = scmp.eq.s32.totalorder %s9, 0
    %p69 = por %p67, %p68
    %p70 = scmp.ne.s32.totalorder %s59, %s62
    %p71 = scmp.eq.s32.totalorder %s14, 5
    %p72 = por %p70, %p71
    %p73 = scmp.ne.s32.totalorder %s62, %s63
    %p74 = scmp.eq.s32.totalorder %s14, 0
    %p75 = por %p73, %p74
    %p76 = scmp.ne.s32.totalorder %s62, %s63
    %p77 = scmp.eq.s32.totalorder %s15, 5
    %p78 = por %p76, %p77
    %p80 = scmp.ne.s32.totalorder %s63, %s79
    %p81 = scmp.eq.s32.totalorder %s15, 0
    %p82 = por %p80, %p81
    %s83 = ssub.s32 %s16, %s28
    %p84 = scmp.eq.s32.totalorder %s83, 0
    %s86 = sadd.s32 %s85, 1
    %s87 = scalar_select %p84, %s85, %s86
    %p90 = pneg %p84
    %p91 = scmp.eq.s32.totalorder %s9, 5
    %p92 = por %p90, %p91
    %p93 = scmp.ne.s32.totalorder %s85, %s88
    %p94 = scmp.eq.s32.totalorder %s9, 0
    %p95 = por %p93, %p94
    %p96 = scmp.ne.s32.totalorder %s85, %s88
    %p97 = scmp.eq.s32.totalorder %s14, 5
    %p98 = por %p96, %p97
    %p99 = scmp.ne.s32.totalorder %s88, %s89
    %p100 = scmp.eq.s32.totalorder %s14, 0
    %p101 = por %p99, %p100
    %p102 = scmp.ne.s32.totalorder %s88, %s89
    %p103 = scmp.eq.s32.totalorder %s15, 5
    %p104 = por %p102, %p103
    %p106 = scmp.ne.s32.totalorder %s89, %s105
    %p107 = scmp.eq.s32.totalorder %s15, 0
    %p108 = por %p106, %p107
    %s109 = ssub.s32 %s16, %s28
    %s110 = ssub.s32 %s17, %s24
    %s111 = sor.u32 %s109, %s110
    %p112 = scmp.eq.s32.totalorder %s111, 0
    %s114 = sadd.s32 %s113, 1
    %s115 = scalar_select %p112, %s113, %s114
    %p118 = pneg %p112
    %p119 = scmp.eq.s32.totalorder %s9, 5
    %p120 = por %p118, %p119
    %p121 = scmp.ne.s32.totalorder %s113, %s116
    %p122 = scmp.eq.s32.totalorder %s9, 0
    %p123 = por %p121, %p122
    %p124 = scmp.ne.s32.totalorder %s113, %s116
    %p125 = scmp.eq.s32.totalorder %s14, 5
    %p126 = por %p124, %p125
    %p127 = scmp.ne.s32.totalorder %s116, %s117
    %p128 = scmp.eq.s32.totalorder %s14, 0
    %p129 = por %p127, %p128
    %p130 = scmp.ne.s32.totalorder %s116, %s117
    %p131 = scmp.eq.s32.totalorder %s15, 5
    %p132 = por %p130, %p131
    %p134 = scmp.ne.s32.totalorder %s117, %s133
    %p135 = scmp.eq.s32.totalorder %s15, 0
    %p136 = por %p134, %p135
    %p137 = scmp.le.s32.totalorder 1, %s9
    %p138 = scmp.lt.s32.totalorder %s9, 7
    %p139 = pnand %p137, %p138
    %p140 = pneg %p139
    // Predicated region
    $region9: #{_arm_group_forward.1} parent=5 // pred_check
      _
    $region10: #{_arm_group_forward.1} parent=5 // pred_check_branch
      %142 = sbr.rel (%p139) target = $region12
    $region11: #{_arm_group_forward.1} parent=5 // pred_region
      %s143 = ssub.s32 %s9, 1
    $region12: #{_arm_group_forward.1} parent=5 // pred_fallthru
      _
    %p144 = scmp.lt.s32.totalorder %s9, 6
    // Predicated region
    $region13: #{_arm_group_forward.1} parent=5 // pred_check
      %p145 = pneg %p144
    $region14: #{_arm_group_forward.1} parent=5 // pred_check_branch
      %147 = sbr.rel (%p145) target = $region16
    $region15: #{_arm_group_forward.1} parent=5 // pred_region
      // Predicated region
      $region17: #{_arm_group_forward.1} parent=15 // pred_check
        %p148 = pneg %p43
      $region18: #{_arm_group_forward.1} parent=15 // pred_check_branch
        %150 = sbr.rel (%p148) target = $region20
      $region19: #{_arm_group_forward.1} parent=15 // pred_region
        %p151 = scmp.lt.s32.totalorder %s16, 2
        %s152 = scalar_select %p151, %s16, 2
        %p153 = scmp.lt.s32.totalorder %s17, 1
        %s154 = scalar_select %p153, %s17, 1
        %s155 = smul.addr %s154, 52
        %s156 = smul.addr %s152, 104
        %s157 = sadd.s32 %s155, %s156
        %s158 = smul.addr %s157, 4
        %s159 = scalar_lea.vmem %s0, %s158
      $region20: #{_arm_group_forward.1} parent=15 // pred_fallthru
        _
      // Predicated region
      $region21: #{_arm_group_forward.1} parent=15 // pred_check
        %p160 = pneg %p69
      $region22: #{_arm_group_forward.1} parent=15 // pred_check_branch
        %162 = sbr.rel (%p160) target = $region24
      $region23: #{_arm_group_forward.1} parent=15 // pred_region
        %p163 = scmp.lt.s32.totalorder %s16, 2
        %s164 = scalar_select %p163, %s16, 2
        %s165 = smul.addr %s164, 128
        %s166 = smul.addr %s165, 4
        %s167 = scalar_lea.vmem %s1, %s166
      $region24: #{_arm_group_forward.1} parent=15 // pred_fallthru
        _
      // Predicated region
      $region25: #{_arm_group_forward.1} parent=15 // pred_check
        %p168 = pneg %p95
      $region26: #{_arm_group_forward.1} parent=15 // pred_check_branch
        %170 = sbr.rel (%p168) target = $region28
      $region27: #{_arm_group_forward.1} parent=15 // pred_region
        %p171 = scmp.lt.s32.totalorder %s16, 2
        %s172 = scalar_select %p171, %s16, 2
        %s173 = scalar_lea.vmem %s2, %s172
      $region28: #{_arm_group_forward.1} parent=15 // pred_fallthru
        _
    $region16: #{_arm_group_forward.1} parent=5 // pred_fallthru
      _
    %p174 = scmp.le.s32.totalorder 1, %s9
    %p175 = scmp.lt.s32.totalorder %s9, 7
    %p176 = pnand %p174, %p175
    %p177 = pneg %p176
    // Predicated region
    $region29: #{_arm_group_forward.1} parent=5 // pred_check
      _
    $region30: #{_arm_group_forward.1} parent=5 // pred_check_branch
      %179 = sbr.rel (%p176) target = $region32
    $region31: #{_arm_group_forward.1} parent=5 // pred_region
      %s180 = ssub.s32 %s9, 1
      %p181 = scmp.lt.s32.totalorder %s18, 2
      %s182 = scalar_select %p181, %s18, 2
      %p183 = scmp.lt.s32.totalorder %s19, 1
      %s184 = scalar_select %p183, %s19, 1
      %s185 = smul.addr %s184, 52
      %s186 = smul.addr %s182, 104
      %s187 = sadd.s32 %s185, %s186
      %s188 = smul.addr %s187, 4
      %s189 = scalar_lea.vmem %s0, %s188
      %p190 = pneg %p49
      %p191 = pneg %p46
      %p192 = scmp.lt.s32.totalorder %s18, 2
      %s193 = scalar_select %p192, %s18, 2
      %s194 = smul.addr %s193, 128
      %s195 = smul.addr %s194, 4
      %s196 = scalar_lea.vmem %s1, %s195
      %p197 = pneg %p75
      %p198 = pneg %p72
      %p199 = scmp.lt.s32.totalorder %s18, 2
      %s200 = scalar_select %p199, %s18, 2
      %s201 = scalar_lea.vmem %s2, %s200
      %p202 = pneg %p101
      %p203 = pneg %p98
      %p204 = pneg %p129
      %p205 = pneg %p126
      %p206 = scmp.lt.s32.totalorder %s18, 2
      %s207 = scalar_select %p206, %s18, 2
      %p208 = scmp.lt.s32.totalorder %s19, 1
      %s209 = scalar_select %p208, %s19, 1
      %s210 = smul.addr %s209, 10
      %s211 = smul.addr %s207, 20
      %s212 = sadd.s32 %s210, %s211
      %s213 = smul.addr %s212, 8
      %s214 = scalar_lea.vmem %s3, %s213
      %p215 = scmp.lt.s32.totalorder %s18, 2
      %s216 = scalar_select %p215, %s18, 2
      %p217 = scmp.lt.s32.totalorder %s19, 1
      %s218 = scalar_select %p217, %s19, 1
      %s219 = smul.addr %s218, 52
      %s220 = smul.addr %s216, 104
      %s221 = sadd.s32 %s219, %s220
      %s222 = smul.addr %s221, 4
      %s223 = scalar_lea.vmem %s0, %s222
      %p224 = scmp.lt.s32.totalorder %s18, 2
      %s225 = scalar_select %p224, %s18, 2
      %s226 = smul.addr %s225, 128
      %s227 = smul.addr %s226, 4
      %s228 = scalar_lea.vmem %s1, %s227
      %p229 = scmp.lt.s32.totalorder %s18, 2
      %s230 = scalar_select %p229, %s18, 2
      %s231 = scalar_lea.vmem %s2, %s230
      %p232 = scmp.lt.s32.totalorder %s18, 2
      %s233 = scalar_select %p232, %s18, 2
      %p234 = scmp.lt.s32.totalorder %s19, 1
      %s235 = scalar_select %p234, %s19, 1
      %s236 = smul.addr %s235, 10
      %s237 = smul.addr %s233, 20
      %s238 = sadd.s32 %s236, %s237
      %s239 = smul.addr %s238, 8
      %s240 = scalar_lea.vmem %s3, %s239
      %v241 = vld [vmem:[%s223] sm:$0xff]
      %v242 = vld [vmem:[%s223 + $0x8] sm:$0xff]
      %v243 = vld [vmem:[%s223 + $0x10] sm:$0xff]
      %v244 = vld [vmem:[%s223 + $0x18] sm:$0xff]
      %v245 = vld [vmem:[%s223 + $0x20] sm:$0xff]
      %v246 = vld [vmem:[%s223 + $0x28] sm:$0xff]
      %v247 = vld [vmem:[%s223 + $0x30] sm:$0xff]
      %v248 = vld [vmem:[%s223 + $0x38] sm:$0xff]
      %v249 = vld [vmem:[%s223 + $0x40] sm:$0xff]
      %v250 = vld [vmem:[%s223 + $0x48] sm:$0xff]
      %v251 = vld [vmem:[%s223 + $0x50] sm:$0xff]
      %v252 = vld [vmem:[%s223 + $0x58] sm:$0xff]
      %v253 = vld [vmem:[%s223 + $0x60] sm:$0xff]
      %v254 = vld [vmem:[%s223 + $0x68] sm:$0xff]
      %v255 = vld [vmem:[%s223 + $0x70] sm:$0xff]
      %v256 = vld [vmem:[%s223 + $0x78] sm:$0xff]
      %v257 = vld [vmem:[%s223 + $0x80] sm:$0xff]
      %v258 = vld [vmem:[%s223 + $0x88] sm:$0xff]
      %v259 = vld [vmem:[%s223 + $0x90] sm:$0xff]
      %v260 = vld [vmem:[%s223 + $0x98] sm:$0xff]
      %v261 = vld [vmem:[%s223 + $0xa0] sm:$0xff]
      %v262 = vld [vmem:[%s223 + $0xa8] sm:$0xff]
      %v263 = vld [vmem:[%s223 + $0xb0] sm:$0xff]
      %v264 = vld [vmem:[%s223 + $0xb8] sm:$0xff]
      %v265 = vld [vmem:[%s223 + $0xc0] sm:$0xff]
      %v266 = vld [vmem:[%s223 + $0xc8] sm:$0xff]
      %v267 = vld [vmem:[%s228] sm:$0xff]
      %v268 = vld [vmem:[%s228 + $0x8] sm:$0xff]
      %v269 = vld [vmem:[%s228 + $0x10] sm:$0xff]
      %v270 = vld [vmem:[%s228 + $0x18] sm:$0xff]
      %v271 = vld [vmem:[%s228 + $0x20] sm:$0xff]
      %v272 = vld [vmem:[%s228 + $0x28] sm:$0xff]
      %v273 = vld [vmem:[%s228 + $0x30] sm:$0xff]
      %v274 = vld [vmem:[%s228 + $0x38] sm:$0xff]
      %v275 = vld [vmem:[%s228 + $0x40] sm:$0xff]
      %v276 = vld [vmem:[%s228 + $0x48] sm:$0xff]
      %v277 = vld [vmem:[%s228 + $0x50] sm:$0xff]
      %v278 = vld [vmem:[%s228 + $0x58] sm:$0xff]
      %v279 = vld [vmem:[%s228 + $0x60] sm:$0xff]
      %v280 = vld [vmem:[%s228 + $0x68] sm:$0xff]
      %v281 = vld [vmem:[%s228 + $0x70] sm:$0xff]
      %v282 = vld [vmem:[%s228 + $0x78] sm:$0xff]
      %v283 = vld [vmem:[%s228 + $0x80] sm:$0xff]
      %v284 = vld [vmem:[%s228 + $0x88] sm:$0xff]
      %v285 = vld [vmem:[%s228 + $0x90] sm:$0xff]
      %v286 = vld [vmem:[%s228 + $0x98] sm:$0xff]
      %v287 = vld [vmem:[%s228 + $0xa0] sm:$0xff]
      %v288 = vld [vmem:[%s228 + $0xa8] sm:$0xff]
      %v289 = vld [vmem:[%s228 + $0xb0] sm:$0xff]
      %v290 = vld [vmem:[%s228 + $0xb8] sm:$0xff]
      %v291 = vld [vmem:[%s228 + $0xc0] sm:$0xff]
      %v292 = vld [vmem:[%s228 + $0xc8] sm:$0xff]
      %v293 = vld [vmem:[%s228 + $0xd0] sm:$0xff]
      %v294 = vld [vmem:[%s228 + $0xd8] sm:$0xff]
      %v295 = vld [vmem:[%s228 + $0xe0] sm:$0xff]
      %v296 = vld [vmem:[%s228 + $0xe8] sm:$0xff]
      %v297 = vld [vmem:[%s228 + $0xf0] sm:$0xff]
      %v298 = vld [vmem:[%s228 + $0xf8] sm:$0xff]
      %v299 = vld [vmem:[%s228 + $0x100] sm:$0xff]
      %v300 = vld [vmem:[%s228 + $0x108] sm:$0xff]
      %v301 = vld [vmem:[%s228 + $0x110] sm:$0xff]
      %v302 = vld [vmem:[%s228 + $0x118] sm:$0xff]
      %v303 = vld [vmem:[%s228 + $0x120] sm:$0xff]
      %v304 = vld [vmem:[%s228 + $0x128] sm:$0xff]
      %v305 = vld [vmem:[%s228 + $0x130] sm:$0xff]
      %v306 = vld [vmem:[%s228 + $0x138] sm:$0xff]
      %v307 = vld [vmem:[%s228 + $0x140] sm:$0xff]
      %v308 = vld [vmem:[%s228 + $0x148] sm:$0xff]
      %v309 = vld [vmem:[%s228 + $0x150] sm:$0xff]
      %v310 = vld [vmem:[%s228 + $0x158] sm:$0xff]
      %v311 = vld [vmem:[%s228 + $0x160] sm:$0xff]
      %v312 = vld [vmem:[%s228 + $0x168] sm:$0xff]
      %v313 = vld [vmem:[%s228 + $0x170] sm:$0xff]
      %v314 = vld [vmem:[%s228 + $0x178] sm:$0xff]
      %v315 = vld [vmem:[%s228 + $0x180] sm:$0xff]
      %v316 = vld [vmem:[%s228 + $0x188] sm:$0xff]
      %v317 = vld [vmem:[%s228 + $0x190] sm:$0xff]
      %v318 = vld [vmem:[%s228 + $0x198] sm:$0xff]
      %v319 = vld [vmem:[%s228 + $0x1a0] sm:$0xff]
      %v320 = vld [vmem:[%s228 + $0x1a8] sm:$0xff]
      %v321 = vld [vmem:[%s228 + $0x1b0] sm:$0xff]
      %v322 = vld [vmem:[%s228 + $0x1b8] sm:$0xff]
      %v323 = vld [vmem:[%s228 + $0x1c0] sm:$0xff]
      %v324 = vld [vmem:[%s228 + $0x1c8] sm:$0xff]
      %v325 = vld [vmem:[%s228 + $0x1d0] sm:$0xff]
      %v326 = vld [vmem:[%s228 + $0x1d8] sm:$0xff]
      %v327 = vld [vmem:[%s228 + $0x1e0] sm:$0xff]
      %v328 = vld [vmem:[%s228 + $0x1e8] sm:$0xff]
      %v329 = vld [vmem:[%s228 + $0x1f0] sm:$0xff]
      %v330 = vld [vmem:[%s228 + $0x1f8] sm:$0xff]
      %v357 = vunpack.c.l.b16 %v241
      %v358 = vunpack.c.h.b16 %v241
      %v359 = vunpack.c.l.b16 %v242
      %v360 = vunpack.c.h.b16 %v242
      %v361 = vunpack.c.l.b16 %v243
      %v362 = vunpack.c.h.b16 %v243
      %v363 = vunpack.c.l.b16 %v244
      %v364 = vunpack.c.h.b16 %v244
      %v365 = vunpack.c.l.b16 %v245
      %v366 = vunpack.c.h.b16 %v245
      %v367 = vunpack.c.l.b16 %v246
      %v368 = vunpack.c.h.b16 %v246
      %v369 = vunpack.c.l.b16 %v247
      %v370 = vunpack.c.h.b16 %v247
      %v371 = vunpack.c.l.b16 %v248
      %v372 = vunpack.c.h.b16 %v248
      %v373 = vunpack.c.l.b16 %v249
      %v374 = vunpack.c.h.b16 %v249
      %v375 = vunpack.c.l.b16 %v250
      %v376 = vunpack.c.h.b16 %v250
      %v377 = vunpack.c.l.b16 %v251
      %v378 = vunpack.c.h.b16 %v251
      %v379 = vunpack.c.l.b16 %v252
      %v380 = vunpack.c.h.b16 %v252
      %v381 = vunpack.c.l.b16 %v253
      %v382 = vunpack.c.h.b16 %v253
      %v383 = vunpack.c.l.b16 %v254
      %v384 = vunpack.c.h.b16 %v254
      %v385 = vunpack.c.l.b16 %v255
      %v386 = vunpack.c.h.b16 %v255
      %v387 = vunpack.c.l.b16 %v256
      %v388 = vunpack.c.h.b16 %v256
      %v389 = vunpack.c.l.b16 %v257
      %v390 = vunpack.c.h.b16 %v257
      %v391 = vunpack.c.l.b16 %v258
      %v392 = vunpack.c.h.b16 %v258
      %v393 = vunpack.c.l.b16 %v259
      %v394 = vunpack.c.h.b16 %v259
      %v395 = vunpack.c.l.b16 %v260
      %v396 = vunpack.c.h.b16 %v260
      %v397 = vunpack.c.l.b16 %v261
      %v398 = vunpack.c.h.b16 %v261
      %v399 = vunpack.c.l.b16 %v262
      %v400 = vunpack.c.h.b16 %v262
      %v401 = vunpack.c.l.b16 %v263
      %v402 = vunpack.c.h.b16 %v263
      %v403 = vunpack.c.l.b16 %v264
      %v404 = vunpack.c.h.b16 %v264
      %v405 = vunpack.c.l.b16 %v265
      %v406 = vunpack.c.h.b16 %v265
      %v407 = vunpack.c.l.b16 %v266
      %v408 = vunpack.c.h.b16 %v266
      %v409 = vpack.c.b16 %v361, %v357
      %v410 = vpack.c.b16 %v362, %v358
      %v411 = vpack.c.b16 %v363, %v359
      %v412 = vpack.c.b16 %v364, %v360
      %v413 = vpack.c.b16 %v369, %v365
      %v414 = vpack.c.b16 %v370, %v366
      %v415 = vpack.c.b16 %v371, %v367
      %v416 = vpack.c.b16 %v372, %v368
      %v417 = vpack.c.b16 %v377, %v373
      %v418 = vpack.c.b16 %v378, %v374
      %v419 = vpack.c.b16 %v379, %v375
      %v420 = vpack.c.b16 %v380, %v376
      %v421 = vpack.c.b16 %v385, %v381
      %v422 = vpack.c.b16 %v386, %v382
      %v423 = vpack.c.b16 %v387, %v383
      %v424 = vpack.c.b16 %v388, %v384
      %v425 = vpack.c.b16 %v393, %v389
      %v426 = vpack.c.b16 %v394, %v390
      %v427 = vpack.c.b16 %v395, %v391
      %v428 = vpack.c.b16 %v396, %v392
      %v429 = vpack.c.b16 %v401, %v397
      %v430 = vpack.c.b16 %v402, %v398
      %v431 = vpack.c.b16 %v403, %v399
      %v432 = vpack.c.b16 %v404, %v400
      %v433 = vpack.c.b16 %v405, %v405
      %v434 = vpack.c.b16 %v406, %v406
      %v435 = vpack.c.b16 %v407, %v407
      %v436 = vpack.c.b16 %v408, %v408
      %v529 = vunpack.c.l.b16 %v267
      %v530 = vunpack.c.h.b16 %v267
      %v531 = vunpack.c.l.b16 %v268
      %v532 = vunpack.c.h.b16 %v268
      %v533 = vunpack.c.l.b16 %v269
      %v534 = vunpack.c.h.b16 %v269
      %v535 = vunpack.c.l.b16 %v270
      %v536 = vunpack.c.h.b16 %v270
      %v537 = vunpack.c.l.b16 %v271
      %v538 = vunpack.c.h.b16 %v271
      %v539 = vunpack.c.l.b16 %v272
      %v540 = vunpack.c.h.b16 %v272
      %v541 = vunpack.c.l.b16 %v273
      %v542 = vunpack.c.h.b16 %v273
      %v543 = vunpack.c.l.b16 %v274
      %v544 = vunpack.c.h.b16 %v274
      %v545 = vunpack.c.l.b16 %v275
      %v546 = vunpack.c.h.b16 %v275
      %v547 = vunpack.c.l.b16 %v276
      %v548 = vunpack.c.h.b16 %v276
      %v549 = vunpack.c.l.b16 %v277
      %v550 = vunpack.c.h.b16 %v277
      %v551 = vunpack.c.l.b16 %v278
      %v552 = vunpack.c.h.b16 %v278
      %v553 = vunpack.c.l.b16 %v279
      %v554 = vunpack.c.h.b16 %v279
      %v555 = vunpack.c.l.b16 %v280
      %v556 = vunpack.c.h.b16 %v280
      %v557 = vunpack.c.l.b16 %v281
      %v558 = vunpack.c.h.b16 %v281
      %v559 = vunpack.c.l.b16 %v282
      %v560 = vunpack.c.h.b16 %v282
      %v561 = vunpack.c.l.b16 %v283
      %v562 = vunpack.c.h.b16 %v283
      %v563 = vunpack.c.l.b16 %v284
      %v564 = vunpack.c.h.b16 %v284
      %v565 = vunpack.c.l.b16 %v285
      %v566 = vunpack.c.h.b16 %v285
      %v567 = vunpack.c.l.b16 %v286
      %v568 = vunpack.c.h.b16 %v286
      %v569 = vunpack.c.l.b16 %v287
      %v570 = vunpack.c.h.b16 %v287
      %v571 = vunpack.c.l.b16 %v288
      %v572 = vunpack.c.h.b16 %v288
      %v573 = vunpack.c.l.b16 %v289
      %v574 = vunpack.c.h.b16 %v289
      %v575 = vunpack.c.l.b16 %v290
      %v576 = vunpack.c.h.b16 %v290
      %v577 = vunpack.c.l.b16 %v291
      %v578 = vunpack.c.h.b16 %v291
      %v579 = vunpack.c.l.b16 %v292
      %v580 = vunpack.c.h.b16 %v292
      %v581 = vunpack.c.l.b16 %v293
      %v582 = vunpack.c.h.b16 %v293
      %v583 = vunpack.c.l.b16 %v294
      %v584 = vunpack.c.h.b16 %v294
      %v585 = vunpack.c.l.b16 %v295
      %v586 = vunpack.c.h.b16 %v295
      %v587 = vunpack.c.l.b16 %v296
      %v588 = vunpack.c.h.b16 %v296
      %v589 = vunpack.c.l.b16 %v297
      %v590 = vunpack.c.h.b16 %v297
      %v591 = vunpack.c.l.b16 %v298
      %v592 = vunpack.c.h.b16 %v298
      %v593 = vunpack.c.l.b16 %v299
      %v594 = vunpack.c.h.b16 %v299
      %v595 = vunpack.c.l.b16 %v300
      %v596 = vunpack.c.h.b16 %v300
      %v597 = vunpack.c.l.b16 %v301
      %v598 = vunpack.c.h.b16 %v301
      %v599 = vunpack.c.l.b16 %v302
      %v600 = vunpack.c.h.b16 %v302
      %v601 = vunpack.c.l.b16 %v303
      %v602 = vunpack.c.h.b16 %v303
      %v603 = vunpack.c.l.b16 %v304
      %v604 = vunpack.c.h.b16 %v304
      %v605 = vunpack.c.l.b16 %v305
      %v606 = vunpack.c.h.b16 %v305
      %v607 = vunpack.c.l.b16 %v306
      %v608 = vunpack.c.h.b16 %v306
      %v609 = vunpack.c.l.b16 %v307
      %v610 = vunpack.c.h.b16 %v307
      %v611 = vunpack.c.l.b16 %v308
      %v612 = vunpack.c.h.b16 %v308
      %v613 = vunpack.c.l.b16 %v309
      %v614 = vunpack.c.h.b16 %v309
      %v615 = vunpack.c.l.b16 %v310
      %v616 = vunpack.c.h.b16 %v310
      %v617 = vunpack.c.l.b16 %v311
      %v618 = vunpack.c.h.b16 %v311
      %v619 = vunpack.c.l.b16 %v312
      %v620 = vunpack.c.h.b16 %v312
      %v621 = vunpack.c.l.b16 %v313
      %v622 = vunpack.c.h.b16 %v313
      %v623 = vunpack.c.l.b16 %v314
      %v624 = vunpack.c.h.b16 %v314
      %v625 = vunpack.c.l.b16 %v315
      %v626 = vunpack.c.h.b16 %v315
      %v627 = vunpack.c.l.b16 %v316
      %v628 = vunpack.c.h.b16 %v316
      %v629 = vunpack.c.l.b16 %v317
      %v630 = vunpack.c.h.b16 %v317
      %v631 = vunpack.c.l.b16 %v318
      %v632 = vunpack.c.h.b16 %v318
      %v633 = vunpack.c.l.b16 %v319
      %v634 = vunpack.c.h.b16 %v319
      %v635 = vunpack.c.l.b16 %v320
      %v636 = vunpack.c.h.b16 %v320
      %v637 = vunpack.c.l.b16 %v321
      %v638 = vunpack.c.h.b16 %v321
      %v639 = vunpack.c.l.b16 %v322
      %v640 = vunpack.c.h.b16 %v322
      %v641 = vunpack.c.l.b16 %v323
      %v642 = vunpack.c.h.b16 %v323
      %v643 = vunpack.c.l.b16 %v324
      %v644 = vunpack.c.h.b16 %v324
      %v645 = vunpack.c.l.b16 %v325
      %v646 = vunpack.c.h.b16 %v325
      %v647 = vunpack.c.l.b16 %v326
      %v648 = vunpack.c.h.b16 %v326
      %v649 = vunpack.c.l.b16 %v327
      %v650 = vunpack.c.h.b16 %v327
      %v651 = vunpack.c.l.b16 %v328
      %v652 = vunpack.c.h.b16 %v328
      %v653 = vunpack.c.l.b16 %v329
      %v654 = vunpack.c.h.b16 %v329
      %v655 = vunpack.c.l.b16 %v330
      %v656 = vunpack.c.h.b16 %v330
      %v657 = vpack.c.b16 %v531, %v529
      %v658 = vpack.c.b16 %v532, %v530
      %v659 = vpack.c.b16 %v535, %v533
      %v660 = vpack.c.b16 %v536, %v534
      %v661 = vpack.c.b16 %v539, %v537
      %v662 = vpack.c.b16 %v540, %v538
      %v663 = vpack.c.b16 %v543, %v541
      %v664 = vpack.c.b16 %v544, %v542
      %v665 = vpack.c.b16 %v547, %v545
      %v666 = vpack.c.b16 %v548, %v546
      %v667 = vpack.c.b16 %v551, %v549
      %v668 = vpack.c.b16 %v552, %v550
      %v669 = vpack.c.b16 %v555, %v553
      %v670 = vpack.c.b16 %v556, %v554
      %v671 = vpack.c.b16 %v559, %v557
      %v672 = vpack.c.b16 %v560, %v558
      %v673 = vpack.c.b16 %v563, %v561
      %v674 = vpack.c.b16 %v564, %v562
      %v675 = vpack.c.b16 %v567, %v565
      %v676 = vpack.c.b16 %v568, %v566
      %v677 = vpack.c.b16 %v571, %v569
      %v678 = vpack.c.b16 %v572, %v570
      %v679 = vpack.c.b16 %v575, %v573
      %v680 = vpack.c.b16 %v576, %v574
      %v681 = vpack.c.b16 %v579, %v577
      %v682 = vpack.c.b16 %v580, %v578
      %v683 = vpack.c.b16 %v583, %v581
      %v684 = vpack.c.b16 %v584, %v582
      %v685 = vpack.c.b16 %v587, %v585
      %v686 = vpack.c.b16 %v588, %v586
      %v687 = vpack.c.b16 %v591, %v589
      %v688 = vpack.c.b16 %v592, %v590
      %v689 = vpack.c.b16 %v595, %v593
      %v690 = vpack.c.b16 %v596, %v594
      %v691 = vpack.c.b16 %v599, %v597
      %v692 = vpack.c.b16 %v600, %v598
      %v693 = vpack.c.b16 %v603, %v601
      %v694 = vpack.c.b16 %v604, %v602
      %v695 = vpack.c.b16 %v607, %v605
      %v696 = vpack.c.b16 %v608, %v606
      %v697 = vpack.c.b16 %v611, %v609
      %v698 = vpack.c.b16 %v612, %v610
      %v699 = vpack.c.b16 %v615, %v613
      %v700 = vpack.c.b16 %v616, %v614
      %v701 = vpack.c.b16 %v619, %v617
      %v702 = vpack.c.b16 %v620, %v618
      %v703 = vpack.c.b16 %v623, %v621
      %v704 = vpack.c.b16 %v624, %v622
      %v705 = vpack.c.b16 %v627, %v625
      %v706 = vpack.c.b16 %v628, %v626
      %v707 = vpack.c.b16 %v631, %v629
      %v708 = vpack.c.b16 %v632, %v630
      %v709 = vpack.c.b16 %v635, %v633
      %v710 = vpack.c.b16 %v636, %v634
      %v711 = vpack.c.b16 %v639, %v637
      %v712 = vpack.c.b16 %v640, %v638
      %v713 = vpack.c.b16 %v643, %v641
      %v714 = vpack.c.b16 %v644, %v642
      %v715 = vpack.c.b16 %v647, %v645
      %v716 = vpack.c.b16 %v648, %v646
      %v717 = vpack.c.b16 %v651, %v649
      %v718 = vpack.c.b16 %v652, %v650
      %v719 = vpack.c.b16 %v655, %v653
      %v720 = vpack.c.b16 %v656, %v654
      %785 = vmatprep.subr.bf16.mxu0 %v658
      %786 = vmatpush1.bf16.msra.mxu0 %v657
      %787 = vmatprep.subr.bf16.mxu0 %v660
      %788 = vmatpush1.bf16.msra.mxu0 %v659
      %789 = vmatprep.subr.bf16.mxu0 %v662
      %790 = vmatpush1.bf16.msra.mxu0 %v661
      %791 = vmatprep.subr.bf16.mxu0 %v664
      %792 = vmatpush1.bf16.msra.mxu0 %v663
      %793 = vmatprep.subr.bf16.mxu0 %v666
      %794 = vmatpush1.bf16.msra.mxu0 %v665
      %795 = vmatprep.subr.bf16.mxu0 %v668
      %796 = vmatpush1.bf16.msra.mxu0 %v667
      %797 = vmatprep.subr.bf16.mxu0 %v670
      %798 = vmatpush1.bf16.msra.mxu0 %v669
      %799 = vmatprep.subr.bf16.mxu0 %v672
      %800 = vmatpush1.bf16.msra.mxu0 %v671
      %801 = vmatprep.subr.bf16.mxu0 %v674
      %802 = vmatpush1.bf16.msra.mxu0 %v673
      %803 = vmatprep.subr.bf16.mxu0 %v676
      %804 = vmatpush1.bf16.msra.mxu0 %v675
      %805 = vmatprep.subr.bf16.mxu0 %v678
      %806 = vmatpush1.bf16.msra.mxu0 %v677
      %807 = vmatprep.subr.bf16.mxu0 %v680
      %808 = vmatpush1.bf16.msra.mxu0 %v679
      %809 = vmatprep.subr.bf16.mxu0 %v682
      %810 = vmatpush1.bf16.msra.mxu0 %v681
      %811 = vmatprep.subr.bf16.mxu0 %v684
      %812 = vmatpush1.bf16.msra.mxu0 %v683
      %813 = vmatprep.subr.bf16.mxu0 %v686
      %814 = vmatpush1.bf16.msra.mxu0 %v685
      %815 = vmatprep.subr.bf16.mxu0 %v688
      %816 = vmatpush1.bf16.msra.mxu0 %v687
      %817 = vmatprep.mubr.bf16.mxu0 %v410
      %818 = vmatmul.mubr.bf16.gmra.mrb[0].mxu0 %v409
      %v819 = vpop.f32.mrb[0].mxu0
      %v820 = vadd.f32 0.0, %v819
      %v821 = vpop.f32.mrb[0].mxu0
      %v822 = vpop.f32.mrb[0].mxu0
      %v823 = vadd.f32 0.0, %v822
      %v824 = vpop.f32.mrb[0].mxu0
      %825 = vmatprep.mubr.bf16.mxu0 %v414
      %826 = vmatmul.mubr.bf16.gmra.mrb[0].mxu0 %v413
      %v827 = vpop.f32.mrb[0].mxu0
      %v828 = vadd.f32 0.0, %v827
      %v829 = vpop.f32.mrb[0].mxu0
      %v830 = vadd.f32 0.0, %v829
      %v831 = vpop.f32.mrb[0].mxu0
      %v832 = vadd.f32 0.0, %v831
      %v833 = vpop.f32.mrb[0].mxu0
      %v834 = vadd.f32 0.0, %v833
      %835 = vmatprep.mubr.bf16.mxu0 %v418
      %836 = vmatmul.mubr.bf16.gmra.mrb[0].mxu0 %v417
      %v837 = vpop.f32.mrb[0].mxu0
      %v838 = vadd.f32 0.0, %v837
      %v839 = vpop.f32.mrb[0].mxu0
      %v840 = vadd.f32 0.0, %v839
      %v841 = vpop.f32.mrb[0].mxu0
      %v842 = vadd.f32 0.0, %v841
      %v843 = vpop.f32.mrb[0].mxu0
      %v844 = vadd.f32 0.0, %v843
      %845 = vmatprep.mubr.bf16.mxu0 %v422
      %846 = vmatmul.mubr.bf16.gmra.mrb[0].mxu0 %v421
      %v847 = vpop.f32.mrb[0].mxu0
      %v848 = vadd.f32 0.0, %v847
      %v849 = vpop.f32.mrb[0].mxu0
      %v850 = vadd.f32 0.0, %v849
      %v851 = vpop.f32.mrb[0].mxu0
      %v852 = vadd.f32 0.0, %v851
      %v853 = vpop.f32.mrb[0].mxu0
      %v854 = vadd.f32 0.0, %v853
      %855 = vmatprep.mubr.bf16.mxu0 %v426
      %856 = vmatmul.mubr.bf16.gmra.mrb[0].mxu0 %v425
      %v857 = vpop.f32.mrb[0].mxu0
      %v858 = vadd.f32 0.0, %v857
      %v859 = vpop.f32.mrb[0].mxu0
      %v860 = vadd.f32 0.0, %v859
      %v861 = vpop.f32.mrb[0].mxu0
      %v862 = vadd.f32 0.0, %v861
      %v863 = vpop.f32.mrb[0].mxu0
      %v864 = vadd.f32 0.0, %v863
      %865 = vmatprep.mubr.bf16.mxu0 %v430
      %866 = vmatmul.mubr.bf16.gmra.mrb[0].mxu0 %v429
      %v867 = vpop.f32.mrb[0].mxu0
      %v868 = vadd.f32 0.0, %v867
      %v869 = vpop.f32.mrb[0].mxu0
      %v870 = vadd.f32 0.0, %v869
      %v871 = vpop.f32.mrb[0].mxu0
      %v872 = vadd.f32 0.0, %v871
      %v873 = vpop.f32.mrb[0].mxu0
      %v874 = vadd.f32 0.0, %v873
      %875 = vmatprep.mubr.bf16.mxu0 %v434
      %876 = vmatmul.mubr.bf16.gmra.mrb[0].mxu0 %v433
      %v877 = vpop.f32.mrb[0].mxu0
      %v878 = vadd.f32 0.0, %v877
      %v879 = vpop.f32.mrb[0].mxu0
      %v880 = vadd.f32 0.0, %v879
      %v881 = vpop.f32.mrb[0].mxu0
      %v882 = vpop.f32.mrb[0].mxu0
      %883 = vdwg.mxu0
      %884 = vmatprep.subr.bf16.mxu0 %v690
      %885 = vmatpush1.bf16.msra.mxu0 %v689
      %886 = vmatprep.subr.bf16.mxu0 %v692
      %887 = vmatpush1.bf16.msra.mxu0 %v691
      %888 = vmatprep.subr.bf16.mxu0 %v694
      %889 = vmatpush1.bf16.msra.mxu0 %v693
      %890 = vmatprep.subr.bf16.mxu0 %v696
      %891 = vmatpush1.bf16.msra.mxu0 %v695
      %892 = vmatprep.subr.bf16.mxu0 %v698
      %893 = vmatpush1.bf16.msra.mxu0 %v697
      %894 = vmatprep.subr.bf16.mxu0 %v700
      %895 = vmatpush1.bf16.msra.mxu0 %v699
      %896 = vmatprep.subr.bf16.mxu0 %v702
      %897 = vmatpush1.bf16.msra.mxu0 %v701
      %898 = vmatprep.subr.bf16.mxu0 %v704
      %899 = vmatpush1.bf16.msra.mxu0 %v703
      %900 = vmatprep.subr.bf16.mxu0 %v706
      %901 = vmatpush1.bf16.msra.mxu0 %v705
      %902 = vmatprep.subr.bf16.mxu0 %v708
      %903 = vmatpush1.bf16.msra.mxu0 %v707
      %904 = vmatprep.subr.bf16.mxu0 %v710
      %905 = vmatpush1.bf16.msra.mxu0 %v709
      %906 = vmatprep.subr.bf16.mxu0 %v712
      %907 = vmatpush1.bf16.msra.mxu0 %v711
      %908 = vmatprep.subr.bf16.mxu0 %v714
      %909 = vmatpush1.bf16.msra.mxu0 %v713
      %910 = vmatprep.subr.bf16.mxu0 %v716
      %911 = vmatpush1.bf16.msra.mxu0 %v715
      %912 = vmatprep.subr.bf16.mxu0 %v718
      %913 = vmatpush1.bf16.msra.mxu0 %v717
      %914 = vmatprep.subr.bf16.mxu0 %v720
      %915 = vmatpush1.bf16.msra.mxu0 %v719
      %916 = vmatprep.mubr.bf16.mxu0 %v412
      %917 = vmatmul.mubr.bf16.gmra.mrb[0].mxu0 %v411
      %v918 = vpop.f32.mrb[0].mxu0
      %v919 = vadd.f32 %v820, %v918
      %v920 = vpop.f32.mrb[0].mxu0
      %v921 = vpop.f32.mrb[0].mxu0
      %v922 = vadd.f32 %v823, %v921
      %v923 = vpop.f32.mrb[0].mxu0
      %924 = vmatprep.mubr.bf16.mxu0 %v416
      %925 = vmatmul.mubr.bf16.gmra.mrb[0].mxu0 %v415
      %v926 = vpop.f32.mrb[0].mxu0
      %v927 = vadd.f32 %v828, %v926
      %v928 = vpop.f32.mrb[0].mxu0
      %v929 = vadd.f32 %v830, %v928
      %v930 = vpop.f32.mrb[0].mxu0
      %v931 = vadd.f32 %v832, %v930
      %v932 = vpop.f32.mrb[0].mxu0
      %v933 = vadd.f32 %v834, %v932
      %934 = vmatprep.mubr.bf16.mxu0 %v420
      %935 = vmatmul.mubr.bf16.gmra.mrb[0].mxu0 %v419
      %v936 = vpop.f32.mrb[0].mxu0
      %v937 = vadd.f32 %v838, %v936
      %v938 = vpop.f32.mrb[0].mxu0
      %v939 = vadd.f32 %v840, %v938
      %v940 = vpop.f32.mrb[0].mxu0
      %v941 = vadd.f32 %v842, %v940
      %v942 = vpop.f32.mrb[0].mxu0
      %v943 = vadd.f32 %v844, %v942
      %944 = vmatprep.mubr.bf16.mxu0 %v424
      %945 = vmatmul.mubr.bf16.gmra.mrb[0].mxu0 %v423
      %v946 = vpop.f32.mrb[0].mxu0
      %v947 = vadd.f32 %v848, %v946
      %v948 = vpop.f32.mrb[0].mxu0
      %v949 = vadd.f32 %v850, %v948
      %v950 = vpop.f32.mrb[0].mxu0
      %v951 = vadd.f32 %v852, %v950
      %v952 = vpop.f32.mrb[0].mxu0
      %v953 = vadd.f32 %v854, %v952
      %954 = vmatprep.mubr.bf16.mxu0 %v428
      %955 = vmatmul.mubr.bf16.gmra.mrb[0].mxu0 %v427
      %v956 = vpop.f32.mrb[0].mxu0
      %v957 = vadd.f32 %v858, %v956
      %v958 = vpop.f32.mrb[0].mxu0
      %v959 = vadd.f32 %v860, %v958
      %v960 = vpop.f32.mrb[0].mxu0
      %v961 = vadd.f32 %v862, %v960
      %v962 = vpop.f32.mrb[0].mxu0
      %v963 = vadd.f32 %v864, %v962
      %964 = vmatprep.mubr.bf16.mxu0 %v432
      %965 = vmatmul.mubr.bf16.gmra.mrb[0].mxu0 %v431
      %v966 = vpop.f32.mrb[0].mxu0
      %v967 = vadd.f32 %v868, %v966
      %v968 = vpop.f32.mrb[0].mxu0
      %v969 = vadd.f32 %v870, %v968
      %v970 = vpop.f32.mrb[0].mxu0
      %v971 = vadd.f32 %v872, %v970
      %v972 = vpop.f32.mrb[0].mxu0
      %v973 = vadd.f32 %v874, %v972
      %974 = vmatprep.mubr.bf16.mxu0 %v436
      %975 = vmatmul.mubr.bf16.gmra.mrb[0].mxu0 %v435
      %v976 = vpop.f32.mrb[0].mxu0
      %v977 = vadd.f32 %v878, %v976
      %v978 = vpop.f32.mrb[0].mxu0
      %v979 = vadd.f32 %v880, %v978
      %v980 = vpop.f32.mrb[0].mxu0
      %v981 = vpop.f32.mrb[0].mxu0
      %982 = vdwg.mxu0
      %v983 = vld [vmem:[%s231] sm:$0x1]
      %v985 = vlaneseq
      %v986 = vshrl.u32 %v985, 7
      %v987 = vsub.s32 0, %v986
      %v988 = vrot.slane %v983, %v987
      %v990 = vadd.f32 %v988, %v919
      %v991 = vadd.f32 %v988, %v922
      %v992 = vadd.f32 %v988, %v927
      %v993 = vadd.f32 %v988, %v931
      %v994 = vadd.f32 %v988, %v937
      %v995 = vadd.f32 %v988, %v941
      %v996 = vadd.f32 %v988, %v947
      %v997 = vadd.f32 %v988, %v951
      %v998 = vadd.f32 %v988, %v957
      %v999 = vadd.f32 %v988, %v961
      %vm1011 = vcmask 1046528
      %v1012 = vrot.slane %v919, 1
      %v1013 = vrot.slane %v922, 1
      %v1014 = vsel %vm1011, %v1012, %v1013
      %v1015 = vrot.slane %v927, 1
      %v1016 = vsel %vm1011, %v1013, %v1015
      %v1017 = vrot.slane %v931, 1
      %v1018 = vsel %vm1011, %v1015, %v1017
      %v1019 = vrot.slane %v937, 1
      %v1020 = vsel %vm1011, %v1017, %v1019
      %v1021 = vrot.slane %v941, 1
      %v1022 = vsel %vm1011, %v1019, %v1021
      %v1023 = vrot.slane %v947, 1
      %v1024 = vsel %vm1011, %v1021, %v1023
      %v1025 = vrot.slane %v951, 1
      %v1026 = vsel %vm1011, %v1023, %v1025
      %v1027 = vrot.slane %v957, 1
      %v1028 = vsel %vm1011, %v1025, %v1027
      %v1029 = vrot.slane %v961, 1
      %v1030 = vsel %vm1011, %v1027, %v1029
      %v1031 = vrot.slane %v967, 1
      %v1032 = vsel %vm1011, %v1029, %v1031
      %1033 = vrot.lane.b32.xlu0 %v1014, 110
      %v1034 = vpop.permute.xlu0 %1033
      %1035 = vrot.lane.b32.xlu0 %v1016, 110
      %v1036 = vpop.permute.xlu0 %1035
      %1037 = vrot.lane.b32.xlu0 %v1018, 110
      %v1038 = vpop.permute.xlu0 %1037
      %1039 = vrot.lane.b32.xlu0 %v1020, 110
      %v1040 = vpop.permute.xlu0 %1039
      %1041 = vrot.lane.b32.xlu0 %v1022, 110
      %v1042 = vpop.permute.xlu0 %1041
      %1043 = vrot.lane.b32.xlu0 %v1024, 110
      %v1044 = vpop.permute.xlu0 %1043
      %1045 = vrot.lane.b32.xlu0 %v1026, 110
      %v1046 = vpop.permute.xlu0 %1045
      %1047 = vrot.lane.b32.xlu0 %v1028, 110
      %v1048 = vpop.permute.xlu0 %1047
      %1049 = vrot.lane.b32.xlu0 %v1030, 110
      %v1050 = vpop.permute.xlu0 %1049
      %1051 = vrot.lane.b32.xlu0 %v1032, 110
      %v1052 = vpop.permute.xlu0 %1051
      %v1063 = vadd.f32 %v990, %v1034
      %v1064 = vadd.f32 %v991, %v1036
      %v1065 = vadd.f32 %v992, %v1038
      %v1066 = vadd.f32 %v993, %v1040
      %v1067 = vadd.f32 %v994, %v1042
      %v1068 = vadd.f32 %v995, %v1044
      %v1069 = vadd.f32 %v996, %v1046
      %v1070 = vadd.f32 %v997, %v1048
      %v1071 = vadd.f32 %v998, %v1050
      %v1072 = vadd.f32 %v999, %v1052
      %vm1073 = vcmask 1045504
      %v1074 = vrot.slane %v919, 2
      %v1075 = vrot.slane %v922, 2
      %v1076 = vsel %vm1073, %v1074, %v1075
      %v1077 = vrot.slane %v927, 2
      %v1078 = vsel %vm1073, %v1075, %v1077
      %v1079 = vrot.slane %v931, 2
      %v1080 = vsel %vm1073, %v1077, %v1079
      %v1081 = vrot.slane %v937, 2
      %v1082 = vsel %vm1073, %v1079, %v1081
      %v1083 = vrot.slane %v941, 2
      %v1084 = vsel %vm1073, %v1081, %v1083
      %v1085 = vrot.slane %v947, 2
      %v1086 = vsel %vm1073, %v1083, %v1085
      %v1087 = vrot.slane %v951, 2
      %v1088 = vsel %vm1073, %v1085, %v1087
      %v1089 = vrot.slane %v957, 2
      %v1090 = vsel %vm1073, %v1087, %v1089
      %v1091 = vrot.slane %v961, 2
      %v1092 = vsel %vm1073, %v1089, %v1091
      %v1093 = vrot.slane %v967, 2
      %v1094 = vsel %vm1073, %v1091, %v1093
      %1095 = vrot.lane.b32.xlu0 %v1076, 92
      %v1096 = vpop.permute.xlu0 %1095
      %1097 = vrot.lane.b32.xlu0 %v1078, 92
      %v1098 = vpop.permute.xlu0 %1097
      %1099 = vrot.lane.b32.xlu0 %v1080, 92
      %v1100 = vpop.permute.xlu0 %1099
      %1101 = vrot.lane.b32.xlu0 %v1082, 92
      %v1102 = vpop.permute.xlu0 %1101
      %1103 = vrot.lane.b32.xlu0 %v1084, 92
      %v1104 = vpop.permute.xlu0 %1103
      %1105 = vrot.lane.b32.xlu0 %v1086, 92
      %v1106 = vpop.permute.xlu0 %1105
      %1107 = vrot.lane.b32.xlu0 %v1088, 92
      %v1108 = vpop.permute.xlu0 %1107
      %1109 = vrot.lane.b32.xlu0 %v1090, 92
      %v1110 = vpop.permute.xlu0 %1109
      %1111 = vrot.lane.b32.xlu0 %v1092, 92
      %v1112 = vpop.permute.xlu0 %1111
      %1113 = vrot.lane.b32.xlu0 %v1094, 92
      %v1114 = vpop.permute.xlu0 %1113
      %v1125 = vadd.f32 %v1063, %v1096
      %v1126 = vadd.f32 %v1064, %v1098
      %v1127 = vadd.f32 %v1065, %v1100
      %v1128 = vadd.f32 %v1066, %v1102
      %v1129 = vadd.f32 %v1067, %v1104
      %v1130 = vadd.f32 %v1068, %v1106
      %v1131 = vadd.f32 %v1069, %v1108
      %v1132 = vadd.f32 %v1070, %v1110
      %v1133 = vadd.f32 %v1071, %v1112
      %v1134 = vadd.f32 %v1072, %v1114
      %v1136 = vrot.slane %v971, 2
      %v1137 = vsel %vm1073, %v1093, %v1136
      %1138 = vrot.lane.b32.xlu0 %v1078, 74
      %v1139 = vpop.permute.xlu0 %1138
      %1140 = vrot.lane.b32.xlu0 %v1080, 74
      %v1141 = vpop.permute.xlu0 %1140
      %1142 = vrot.lane.b32.xlu0 %v1082, 74
      %v1143 = vpop.permute.xlu0 %1142
      %1144 = vrot.lane.b32.xlu0 %v1084, 74
      %v1145 = vpop.permute.xlu0 %1144
      %1146 = vrot.lane.b32.xlu0 %v1086, 74
      %v1147 = vpop.permute.xlu0 %1146
      %1148 = vrot.lane.b32.xlu0 %v1088, 74
      %v1149 = vpop.permute.xlu0 %1148
      %1150 = vrot.lane.b32.xlu0 %v1090, 74
      %v1151 = vpop.permute.xlu0 %1150
      %1152 = vrot.lane.b32.xlu0 %v1092, 74
      %v1153 = vpop.permute.xlu0 %1152
      %1154 = vrot.lane.b32.xlu0 %v1094, 74
      %v1155 = vpop.permute.xlu0 %1154
      %1156 = vrot.lane.b32.xlu0 %v1137, 74
      %v1157 = vpop.permute.xlu0 %1156
      %v1168 = vadd.f32 %v1125, %v1139
      %v1169 = vadd.f32 %v1126, %v1141
      %v1170 = vadd.f32 %v1127, %v1143
      %v1171 = vadd.f32 %v1128, %v1145
      %v1172 = vadd.f32 %v1129, %v1147
      %v1173 = vadd.f32 %v1130, %v1149
      %v1174 = vadd.f32 %v1131, %v1151
      %v1175 = vadd.f32 %v1132, %v1153
      %v1176 = vadd.f32 %v1133, %v1155
      %v1177 = vadd.f32 %v1134, %v1157
      %vm1178 = vcmask 1044480
      %v1179 = vrot.slane %v922, 3
      %v1180 = vrot.slane %v927, 3
      %v1181 = vsel %vm1178, %v1179, %v1180
      %v1182 = vrot.slane %v931, 3
      %v1183 = vsel %vm1178, %v1180, %v1182
      %v1184 = vrot.slane %v937, 3
      %v1185 = vsel %vm1178, %v1182, %v1184
      %v1186 = vrot.slane %v941, 3
      %v1187 = vsel %vm1178, %v1184, %v1186
      %v1188 = vrot.slane %v947, 3
      %v1189 = vsel %vm1178, %v1186, %v1188
      %v1190 = vrot.slane %v951, 3
      %v1191 = vsel %vm1178, %v1188, %v1190
      %v1192 = vrot.slane %v957, 3
      %v1193 = vsel %vm1178, %v1190, %v1192
      %v1194 = vrot.slane %v961, 3
      %v1195 = vsel %vm1178, %v1192, %v1194
      %v1196 = vrot.slane %v967, 3
      %v1197 = vsel %vm1178, %v1194, %v1196
      %v1198 = vrot.slane %v971, 3
      %v1199 = vsel %vm1178, %v1196, %v1198
      %1200 = vrot.lane.b32.xlu0 %v1181, 56
      %v1201 = vpop.permute.xlu0 %1200
      %1202 = vrot.lane.b32.xlu0 %v1183, 56
      %v1203 = vpop.permute.xlu0 %1202
      %1204 = vrot.lane.b32.xlu0 %v1185, 56
      %v1205 = vpop.permute.xlu0 %1204
      %1206 = vrot.lane.b32.xlu0 %v1187, 56
      %v1207 = vpop.permute.xlu0 %1206
      %1208 = vrot.lane.b32.xlu0 %v1189, 56
      %v1209 = vpop.permute.xlu0 %1208
      %1210 = vrot.lane.b32.xlu0 %v1191, 56
      %v1211 = vpop.permute.xlu0 %1210
      %1212 = vrot.lane.b32.xlu0 %v1193, 56
      %v1213 = vpop.permute.xlu0 %1212
      %1214 = vrot.lane.b32.xlu0 %v1195, 56
      %v1215 = vpop.permute.xlu0 %1214
      %1216 = vrot.lane.b32.xlu0 %v1197, 56
      %v1217 = vpop.permute.xlu0 %1216
      %1218 = vrot.lane.b32.xlu0 %v1199, 56
      %v1219 = vpop.permute.xlu0 %1218
      %v1230 = vadd.f32 %v1168, %v1201
      %v1231 = vadd.f32 %v1169, %v1203
      %v1232 = vadd.f32 %v1170, %v1205
      %v1233 = vadd.f32 %v1171, %v1207
      %v1234 = vadd.f32 %v1172, %v1209
      %v1235 = vadd.f32 %v1173, %v1211
      %v1236 = vadd.f32 %v1174, %v1213
      %v1237 = vadd.f32 %v1175, %v1215
      %v1238 = vadd.f32 %v1176, %v1217
      %v1239 = vadd.f32 %v1177, %v1219
      %vm1240 = vcmask 1043456
      %v1241 = vrot.slane %v922, 4
      %v1242 = vrot.slane %v927, 4
      %v1243 = vsel %vm1240, %v1241, %v1242
      %v1244 = vrot.slane %v931, 4
      %v1245 = vsel %vm1240, %v1242, %v1244
      %v1246 = vrot.slane %v937, 4
      %v1247 = vsel %vm1240, %v1244, %v1246
      %v1248 = vrot.slane %v941, 4
      %v1249 = vsel %vm1240, %v1246, %v1248
      %v1250 = vrot.slane %v947, 4
      %v1251 = vsel %vm1240, %v1248, %v1250
      %v1252 = vrot.slane %v951, 4
      %v1253 = vsel %vm1240, %v1250, %v1252
      %v1254 = vrot.slane %v957, 4
      %v1255 = vsel %vm1240, %v1252, %v1254
      %v1256 = vrot.slane %v961, 4
      %v1257 = vsel %vm1240, %v1254, %v1256
      %v1258 = vrot.slane %v967, 4
      %v1259 = vsel %vm1240, %v1256, %v1258
      %v1260 = vrot.slane %v971, 4
      %v1261 = vsel %vm1240, %v1258, %v1260
      %1262 = vrot.lane.b32.xlu0 %v1243, 38
      %v1263 = vpop.permute.xlu0 %1262
      %1264 = vrot.lane.b32.xlu0 %v1245, 38
      %v1265 = vpop.permute.xlu0 %1264
      %1266 = vrot.lane.b32.xlu0 %v1247, 38
      %v1267 = vpop.permute.xlu0 %1266
      %1268 = vrot.lane.b32.xlu0 %v1249, 38
      %v1269 = vpop.permute.xlu0 %1268
      %1270 = vrot.lane.b32.xlu0 %v1251, 38
      %v1271 = vpop.permute.xlu0 %1270
      %1272 = vrot.lane.b32.xlu0 %v1253, 38
      %v1273 = vpop.permute.xlu0 %1272
      %1274 = vrot.lane.b32.xlu0 %v1255, 38
      %v1275 = vpop.permute.xlu0 %1274
      %1276 = vrot.lane.b32.xlu0 %v1257, 38
      %v1277 = vpop.permute.xlu0 %1276
      %1278 = vrot.lane.b32.xlu0 %v1259, 38
      %v1279 = vpop.permute.xlu0 %1278
      %1280 = vrot.lane.b32.xlu0 %v1261, 38
      %v1281 = vpop.permute.xlu0 %1280
      %v1292 = vadd.f32 %v1230, %v1263
      %v1293 = vadd.f32 %v1231, %v1265
      %v1294 = vadd.f32 %v1232, %v1267
      %v1295 = vadd.f32 %v1233, %v1269
      %v1296 = vadd.f32 %v1234, %v1271
      %v1297 = vadd.f32 %v1235, %v1273
      %v1298 = vadd.f32 %v1236, %v1275
      %v1299 = vadd.f32 %v1237, %v1277
      %v1300 = vadd.f32 %v1238, %v1279
      %v1301 = vadd.f32 %v1239, %v1281
      %v1303 = vrot.slane %v977, 4
      %v1304 = vsel %vm1240, %v1260, %v1303
      %1305 = vrot.lane.b32.xlu0 %v1245, 20
      %v1306 = vpop.permute.xlu0 %1305
      %1307 = vrot.lane.b32.xlu0 %v1247, 20
      %v1308 = vpop.permute.xlu0 %1307
      %1309 = vrot.lane.b32.xlu0 %v1249, 20
      %v1310 = vpop.permute.xlu0 %1309
      %1311 = vrot.lane.b32.xlu0 %v1251, 20
      %v1312 = vpop.permute.xlu0 %1311
      %1313 = vrot.lane.b32.xlu0 %v1253, 20
      %v1314 = vpop.permute.xlu0 %1313
      %1315 = vrot.lane.b32.xlu0 %v1255, 20
      %v1316 = vpop.permute.xlu0 %1315
      %1317 = vrot.lane.b32.xlu0 %v1257, 20
      %v1318 = vpop.permute.xlu0 %1317
      %1319 = vrot.lane.b32.xlu0 %v1259, 20
      %v1320 = vpop.permute.xlu0 %1319
      %1321 = vrot.lane.b32.xlu0 %v1261, 20
      %v1322 = vpop.permute.xlu0 %1321
      %1323 = vrot.lane.b32.xlu0 %v1304, 20
      %v1324 = vpop.permute.xlu0 %1323
      %v1335 = vadd.f32 %v1292, %v1306
      %v1336 = vadd.f32 %v1293, %v1308
      %v1337 = vadd.f32 %v1294, %v1310
      %v1338 = vadd.f32 %v1295, %v1312
      %v1339 = vadd.f32 %v1296, %v1314
      %v1340 = vadd.f32 %v1297, %v1316
      %v1341 = vadd.f32 %v1298, %v1318
      %v1342 = vadd.f32 %v1299, %v1320
      %v1343 = vadd.f32 %v1300, %v1322
      %v1344 = vadd.f32 %v1301, %v1324
      %vm1356 = vcmask 1042432
      %v1357 = vrot.slane %v927, 5
      %v1358 = vrot.slane %v931, 5
      %v1359 = vsel %vm1356, %v1357, %v1358
      %v1360 = vrot.slane %v929, 5
      %v1361 = vrot.slane %v933, 5
      %v1362 = vsel %vm1356, %v1360, %v1361
      %v1363 = vrot.slane %v937, 5
      %v1364 = vsel %vm1356, %v1358, %v1363
      %v1365 = vrot.slane %v939, 5
      %v1366 = vsel %vm1356, %v1361, %v1365
      %v1367 = vrot.slane %v941, 5
      %v1368 = vsel %vm1356, %v1363, %v1367
      %v1369 = vrot.slane %v943, 5
      %v1370 = vsel %vm1356, %v1365, %v1369
      %v1371 = vrot.slane %v947, 5
      %v1372 = vsel %vm1356, %v1367, %v1371
      %v1373 = vrot.slane %v949, 5
      %v1374 = vsel %vm1356, %v1369, %v1373
      %v1375 = vrot.slane %v951, 5
      %v1376 = vsel %vm1356, %v1371, %v1375
      %v1377 = vrot.slane %v953, 5
      %v1378 = vsel %vm1356, %v1373, %v1377
      %v1379 = vrot.slane %v957, 5
      %v1380 = vsel %vm1356, %v1375, %v1379
      %v1381 = vrot.slane %v959, 5
      %v1382 = vsel %vm1356, %v1377, %v1381
      %v1383 = vrot.slane %v961, 5
      %v1384 = vsel %vm1356, %v1379, %v1383
      %v1385 = vrot.slane %v963, 5
      %v1386 = vsel %vm1356, %v1381, %v1385
      %v1387 = vrot.slane %v967, 5
      %v1388 = vsel %vm1356, %v1383, %v1387
      %v1389 = vrot.slane %v969, 5
      %v1390 = vsel %vm1356, %v1385, %v1389
      %v1391 = vrot.slane %v971, 5
      %v1392 = vsel %vm1356, %v1387, %v1391
      %v1393 = vrot.slane %v973, 5
      %v1394 = vsel %vm1356, %v1389, %v1393
      %v1395 = vrot.slane %v977, 5
      %v1396 = vsel %vm1356, %v1391, %v1395
      %v1397 = vrot.slane %v979, 5
      %v1398 = vsel %vm1356, %v1393, %v1397
      %1399 = vrot.lane.b32.xlu0 %v1359, 2
      %v1400 = vpop.permute.xlu0 %1399
      %1401 = vrot.lane.b32.xlu0 %v1362, 2
      %v1402 = vpop.permute.xlu0 %1401
      %1403 = vrot.lane.b32.xlu0 %v1364, 2
      %v1404 = vpop.permute.xlu0 %1403
      %1405 = vrot.lane.b32.xlu0 %v1366, 2
      %v1406 = vpop.permute.xlu0 %1405
      %1407 = vrot.lane.b32.xlu0 %v1368, 2
      %v1408 = vpop.permute.xlu0 %1407
      %1409 = vrot.lane.b32.xlu0 %v1370, 2
      %v1410 = vpop.permute.xlu0 %1409
      %1411 = vrot.lane.b32.xlu0 %v1372, 2
      %v1412 = vpop.permute.xlu0 %1411
      %1413 = vrot.lane.b32.xlu0 %v1374, 2
      %v1414 = vpop.permute.xlu0 %1413
      %1415 = vrot.lane.b32.xlu0 %v1376, 2
      %v1416 = vpop.permute.xlu0 %1415
      %1417 = vrot.lane.b32.xlu0 %v1378, 2
      %v1418 = vpop.permute.xlu0 %1417
      %1419 = vrot.lane.b32.xlu0 %v1380, 2
      %v1420 = vpop.permute.xlu0 %1419
      %1421 = vrot.lane.b32.xlu0 %v1382, 2
      %v1422 = vpop.permute.xlu0 %1421
      %1423 = vrot.lane.b32.xlu0 %v1384, 2
      %v1424 = vpop.permute.xlu0 %1423
      %1425 = vrot.lane.b32.xlu0 %v1386, 2
      %v1426 = vpop.permute.xlu0 %1425
      %1427 = vrot.lane.b32.xlu0 %v1388, 2
      %v1428 = vpop.permute.xlu0 %1427
      %1429 = vrot.lane.b32.xlu0 %v1390, 2
      %v1430 = vpop.permute.xlu0 %1429
      %1431 = vrot.lane.b32.xlu0 %v1392, 2
      %v1432 = vpop.permute.xlu0 %1431
      %1433 = vrot.lane.b32.xlu0 %v1394, 2
      %v1434 = vpop.permute.xlu0 %1433
      %1435 = vrot.lane.b32.xlu0 %v1396, 2
      %v1436 = vpop.permute.xlu0 %1435
      %1437 = vrot.lane.b32.xlu0 %v1398, 2
      %v1438 = vpop.permute.xlu0 %1437
      %vm1439 = vcmask 15360
      %v1440 = vsel %vm1439, %v1400, %v1402
      %v1441 = vsel %vm1439, %v1404, %v1406
      %v1442 = vsel %vm1439, %v1408, %v1410
      %v1443 = vsel %vm1439, %v1412, %v1414
      %v1444 = vsel %vm1439, %v1416, %v1418
      %v1445 = vsel %vm1439, %v1420, %v1422
      %v1446 = vsel %vm1439, %v1424, %v1426
      %v1447 = vsel %vm1439, %v1428, %v1430
      %v1448 = vsel %vm1439, %v1432, %v1434
      %v1449 = vsel %vm1439, %v1436, %v1438
      %v1460 = vadd.f32 %v1335, %v1440
      %v1461 = vadd.f32 %v1336, %v1441
      %v1462 = vadd.f32 %v1337, %v1442
      %v1463 = vadd.f32 %v1338, %v1443
      %v1464 = vadd.f32 %v1339, %v1444
      %v1465 = vadd.f32 %v1340, %v1445
      %v1466 = vadd.f32 %v1341, %v1446
      %v1467 = vadd.f32 %v1342, %v1447
      %v1468 = vadd.f32 %v1343, %v1448
      %v1469 = vadd.f32 %v1344, %v1449
      %vm1470 = vcmask 1041408
      %v1471 = vrot.slane %v929, 6
      %v1472 = vrot.slane %v933, 6
      %v1473 = vsel %vm1470, %v1471, %v1472
      %v1474 = vrot.slane %v939, 6
      %v1475 = vsel %vm1470, %v1472, %v1474
      %v1476 = vrot.slane %v943, 6
      %v1477 = vsel %vm1470, %v1474, %v1476
      %v1478 = vrot.slane %v949, 6
      %v1479 = vsel %vm1470, %v1476, %v1478
      %v1480 = vrot.slane %v953, 6
      %v1481 = vsel %vm1470, %v1478, %v1480
      %v1482 = vrot.slane %v959, 6
      %v1483 = vsel %vm1470, %v1480, %v1482
      %v1484 = vrot.slane %v963, 6
      %v1485 = vsel %vm1470, %v1482, %v1484
      %v1486 = vrot.slane %v969, 6
      %v1487 = vsel %vm1470, %v1484, %v1486
      %v1488 = vrot.slane %v973, 6
      %v1489 = vsel %vm1470, %v1486, %v1488
      %v1490 = vrot.slane %v979, 6
      %v1491 = vsel %vm1470, %v1488, %v1490
      %1492 = vrot.lane.b32.xlu0 %v1473, 112
      %v1493 = vpop.permute.xlu0 %1492
      %1494 = vrot.lane.b32.xlu0 %v1475, 112
      %v1495 = vpop.permute.xlu0 %1494
      %1496 = vrot.lane.b32.xlu0 %v1477, 112
      %v1497 = vpop.permute.xlu0 %1496
      %1498 = vrot.lane.b32.xlu0 %v1479, 112
      %v1499 = vpop.permute.xlu0 %1498
      %1500 = vrot.lane.b32.xlu0 %v1481, 112
      %v1501 = vpop.permute.xlu0 %1500
      %1502 = vrot.lane.b32.xlu0 %v1483, 112
      %v1503 = vpop.permute.xlu0 %1502
      %1504 = vrot.lane.b32.xlu0 %v1485, 112
      %v1505 = vpop.permute.xlu0 %1504
      %1506 = vrot.lane.b32.xlu0 %v1487, 112
      %v1507 = vpop.permute.xlu0 %1506
      %1508 = vrot.lane.b32.xlu0 %v1489, 112
      %v1509 = vpop.permute.xlu0 %1508
      %1510 = vrot.lane.b32.xlu0 %v1491, 112
      %v1511 = vpop.permute.xlu0 %1510
      %v1522 = vadd.f32 %v1460, %v1493
      %v1523 = vadd.f32 %v1461, %v1495
      %v1524 = vadd.f32 %v1462, %v1497
      %v1525 = vadd.f32 %v1463, %v1499
      %v1526 = vadd.f32 %v1464, %v1501
      %v1527 = vadd.f32 %v1465, %v1503
      %v1528 = vadd.f32 %v1466, %v1505
      %v1529 = vadd.f32 %v1467, %v1507
      %v1530 = vadd.f32 %v1468, %v1509
      %v1531 = vadd.f32 %v1469, %v1511
      %vm1532 = vcmask 146432
      %1533 = vst.msk [vmem:[%s240] sm:$0xff] %vm1532, %v1522
      %1534 = vst.msk [vmem:[%s240 + $0x8] sm:$0xff] %vm1532, %v1523
      %1535 = vst.msk [vmem:[%s240 + $0x10] sm:$0xff] %vm1532, %v1524
      %1536 = vst.msk [vmem:[%s240 + $0x18] sm:$0xff] %vm1532, %v1525
      %1537 = vst.msk [vmem:[%s240 + $0x20] sm:$0xff] %vm1532, %v1526
      %1538 = vst.msk [vmem:[%s240 + $0x28] sm:$0xff] %vm1532, %v1527
      %1539 = vst.msk [vmem:[%s240 + $0x30] sm:$0xff] %vm1532, %v1528
      %1540 = vst.msk [vmem:[%s240 + $0x38] sm:$0xff] %vm1532, %v1529
      %1541 = vst.msk [vmem:[%s240 + $0x40] sm:$0xff] %vm1532, %v1530
      %1542 = vst.msk [vmem:[%s240 + $0x48] sm:$0xff] %vm1532, %v1531
      %p1543 = scmp.lt.s32.totalorder %s18, 2
      %s1544 = scalar_select %p1543, %s18, 2
      %p1545 = scmp.lt.s32.totalorder %s19, 1
      %s1546 = scalar_select %p1545, %s19, 1
      %s1547 = smul.addr %s1546, 10
      %s1548 = smul.addr %s1544, 20
      %s1549 = sadd.s32 %s1547, %s1548
      %s1550 = smul.addr %s1549, 8
      %s1551 = scalar_lea.vmem %s3, %s1550
      // Predicated region
      $region33: #{_arm_group_forward.1} parent=31 // pred_check
        %p1552 = pneg %p126
      $region34: #{_arm_group_forward.1} parent=31 // pred_check_branch
        %1554 = sbr.rel (%p1552) target = $region36
      $region35: #{_arm_group_forward.1} parent=31 // pred_region
        _
      $region36: #{_arm_group_forward.1} parent=31 // pred_fallthru
        _
    $region32: #{_arm_group_forward.1} parent=5 // pred_fallthru
      _
    %p1555 = scmp.le.s32.totalorder 2, %s9
    // Predicated region
    $region37: #{_arm_group_forward.1} parent=5 // pred_check
      %p1556 = pneg %p1555
    $region38: #{_arm_group_forward.1} parent=5 // pred_check_branch
      %1558 = sbr.rel (%p1556) target = $region40
    $region39: #{_arm_group_forward.1} parent=5 // pred_region
      %s1559 = ssub.s32 %s9, 2
      // Predicated region
      $region41: #{_arm_group_forward.1} parent=39 // pred_check
        %p1560 = pneg %p132
      $region42: #{_arm_group_forward.1} parent=39 // pred_check_branch
        %1562 = sbr.rel (%p1560) target = $region44
      $region43: #{_arm_group_forward.1} parent=39 // pred_region
        %p1563 = scmp.lt.s32.totalorder %s20, 2
        %s1564 = scalar_select %p1563, %s20, 2
        %p1565 = scmp.lt.s32.totalorder %s21, 1
        %s1566 = scalar_select %p1565, %s21, 1
        %s1567 = smul.addr %s1566, 10
        %s1568 = smul.addr %s1564, 20
        %s1569 = sadd.s32 %s1567, %s1568
        %s1570 = smul.addr %s1569, 8
        %s1571 = scalar_lea.vmem %s3, %s1570
      $region44: #{_arm_group_forward.1} parent=39 // pred_fallthru
        _
    $region40: #{_arm_group_forward.1} parent=5 // pred_fallthru
      _
  $region6: #{_arm_group_forward.1} parent=0 // loop_footer
    %s13 = sadd.s32 1, %s9
  $region7: #{_arm_group_forward.1} parent=0 // loop_footer_branch
    %8 = sbr.rel target = $region3
  $region8: #{_arm_group_forward.1} parent=0 // loop_exit
    _

</llo_original>
